<compile_context>
chip_gen: v5e
topology: v5e:2x2
jax: 0.10.0
libtpu: 0.0.40
codegen_flags: <defaults>
</compile_context>

<pallas_src>
import math

import jax
import jax.numpy as jnp
from jax.experimental import pallas as pl
from jax.experimental.pallas import tpu as pltpu

_SQRT_2_OVER_PI = 0.7978845608028654


# ------------------------------ shared math ---------------------------------

def _gelu(v):
    # tanh-formulation GELU (EUP tanh).  Differs from torch's exact erf GELU
    # by < ~1e-3 absolute, as endorsed by the performance review.
    return 0.5 * v * (1.0 + jnp.tanh(_SQRT_2_OVER_PI * (v + 0.044715 * v * v * v)))


# --------------------------------- kernel -----------------------------------

def _attention_gate_kernel(g_ref, x_ref, wg_ref, bg_ref, wx_ref, bx_ref,
                           wpsi_ref, bpsi_ref, o_ref):
    """Fused attention gate in channel-major (channels x pixels) layout.

        g1  = Wg' @ g + bg'            (eval BN folded into Wg'/bg')
        x1  = Wx' @ x + bx'
        a   = GELU(g1 + x1)
        psi = sigmoid(w_psi @ a + b_psi)   -> lane-dense (1, TM) row
        out = x * psi
    """
    x_f32 = x_ref[...]
    g1 = jnp.dot(wg_ref[...], g_ref[...].astype(jnp.bfloat16),
                 preferred_element_type=jnp.float32) + bg_ref[...]
    x1 = jnp.dot(wx_ref[...], x_f32.astype(jnp.bfloat16),
                 preferred_element_type=jnp.float32) + bx_ref[...]
    a = _gelu(g1 + x1)
    z = jnp.dot(wpsi_ref[...], a.astype(jnp.bfloat16),
                preferred_element_type=jnp.float32) + bpsi_ref[...]
    # sigmoid = 1 / (1 + exp(-z)): exp on EUP, approximate reciprocal on EUP.
    psi = pl.reciprocal(1.0 + jnp.exp(-z), approx=True)
    o_ref[...] = (x_f32 * psi).astype(o_ref.dtype)


# ------------------------------ wrapper --------------------------------------

def _fold_conv_bn(w, b, bn, eps=1e-5):
    """Fold eval-mode BatchNorm into a 1x1 conv: y = (w*s) @ x + ((b-mean)*s + beta)."""
    s = bn["gamma"] / jnp.sqrt(bn["var"] + eps)          # (cout,)
    return w * s[:, None], (b - bn["mean"]) * s + bn["beta"]


def _to_cm(t):
    """(N, C, H, W) -> (C, N*H*W): pixels on the lane dimension."""
    n, c, h, w = t.shape
    return jnp.transpose(t, (1, 0, 2, 3)).reshape(c, n * h * w)


def _from_cm(t_cm, n, h, w):
    """(C, N*H*W) -> (N, C, H, W)."""
    c = t_cm.shape[0]
    return jnp.transpose(t_cm.reshape(c, n, h, w), (1, 0, 2, 3))


def attention_gate_forward(g, x, params):
    """Pallas forward of AttentionGate.  g: (N,F_g,H,W), x: (N,F_l,H,W)."""
    n, f_g, h, w = g.shape
    f_l = x.shape[1]
    f_int = params["wg_w"].shape[0]
    m = n * h * w

    wg, bg = _fold_conv_bn(params["wg_w"], params["wg_b"], params["bn_g"])
    wx, bx = _fold_conv_bn(params["wx_w"], params["wx_b"], params["bn_x"])

    g_cm = _to_cm(g).astype(jnp.float32)
    x_cm = _to_cm(x).astype(jnp.float32)

    # >=2 "parallel" grid steps when possible (feeds both v7x TensorCores)
    # while keeping the lane dimension a multiple of 128 (lane-dense stores).
    tm = 256 if (m % 256 == 0 and m >= 512) else m

    const = lambda i: (0, 0)
    out_cm = pl.pallas_call(
        _attention_gate_kernel,
        out_shape=jax.ShapeDtypeStruct((f_l, m), jnp.float32),
        grid_spec=pltpu.PrefetchScalarGridSpec(
            num_scalar_prefetch=0,
            grid=(m // tm,),
            in_specs=[pl.BlockSpec((f_g, tm), lambda i: (0, i)),
                      pl.BlockSpec((f_l, tm), lambda i: (0, i)),
                      pl.BlockSpec((f_int, f_g), const),
                      pl.BlockSpec((f_int, 1), const),
                      pl.BlockSpec((f_int, f_l), const),
                      pl.BlockSpec((f_int, 1), const),
                      pl.BlockSpec((1, f_int), const),
                      pl.BlockSpec((1, 1), const)],
            out_specs=pl.BlockSpec((f_l, tm), lambda i: (0, i))),
        compiler_params=pltpu.CompilerParams(
            dimension_semantics=("parallel",)),
    )(g_cm, x_cm,
      wg.astype(jnp.bfloat16), bg.reshape(f_int, 1).astype(jnp.float32),
      wx.astype(jnp.bfloat16), bx.reshape(f_int, 1).astype(jnp.float32),
      params["psi_w"].astype(jnp.bfloat16),
      params["psi_b"].reshape(1, 1).astype(jnp.float32))

    return _from_cm(out_cm, n, h, w)


# ------------------------- pure-JAX reference (f32) --------------------------

def attention_gate_reference(g, x, params):
    wg, bg = _fold_conv_bn(params["wg_w"], params["wg_b"], params["bn_g"])
    wx, bx = _fold_conv_bn(params["wx_w"], params["wx_b"], params["bn_x"])
    g1 = jnp.einsum("oc,nchw->nohw", wg, g) + bg[None, :, None, None]
    x1 = jnp.einsum("oc,nchw->nohw", wx, x) + bx[None, :, None, None]
    a = _gelu(g1 + x1)
    z = (jnp.einsum("oc,nchw->nohw", params["psi_w"], a)
         + params["psi_b"][None, :, None, None])
    return x * jax.nn.sigmoid(z)


# ------------------------------ parameter init -------------------------------

def init_params(key, f_g, f_l, f_int):
    ks = jax.random.split(key, 6)

    def conv1x1(k, cin, cout):
        kw, kb = jax.random.split(k)
        bound = 1.0 / math.sqrt(cin)
        w = jax.random.uniform(kw, (cout, cin), jnp.float32, -bound, bound)
        b = jax.random.uniform(kb, (cout,), jnp.float32, -bound, bound)
        return w, b

    def bn(k, c):
        kg, kb = jax.random.split(k)
        # Non-trivial eval-mode running stats so the BN fold is exercised.
        gamma = 1.0 + 0.1 * jax.random.normal(kg, (c,), jnp.float32)
        beta = 0.1 * jax.random.normal(kb, (c,), jnp.float32)
        mean = 0.05 * jax.random.normal(jax.random.fold_in(kg, 1), (c,), jnp.float32)
        var = 1.0 + 0.1 * jax.random.uniform(jax.random.fold_in(kb, 1), (c,),
                                             jnp.float32)
        return dict(gamma=gamma, beta=beta, mean=mean, var=var)

    wg_w, wg_b = conv1x1(ks[0], f_g, f_int)
    wx_w, wx_b = conv1x1(ks[1], f_l, f_int)
    psi_w, psi_b = conv1x1(ks[2], f_int, 1)
    return dict(wg_w=wg_w, wg_b=wg_b, bn_g=bn(ks[3], f_int),
                wx_w=wx_w, wx_b=wx_b, bn_x=bn(ks[4], f_int),
                psi_w=psi_w, psi_b=psi_b)


# ---------------------------------- main -------------------------------------

if __name__ == "__main__":
    key = jax.random.PRNGKey(0)
    pkey, gkey, xkey = jax.random.split(key, 3)

    N, H, W = 2, 16, 16
    F_g, F_l, F_int = 32, 32, 16

    params = init_params(pkey, F_g, F_l, F_int)
    g = jax.random.normal(gkey, (N, F_g, H, W), jnp.float32)
    x = jax.random.normal(xkey, (N, F_l, H, W), jnp.float32)

    fwd = jax.jit(attention_gate_forward)
    out = jax.block_until_ready(fwd(g, x, params))

    assert out.shape == (N, F_l, H, W), out.shape
    assert bool(jnp.all(jnp.isfinite(out)))

    # Numerical check vs an f32 pure-JAX reference (tolerance covers the bf16
    # matmul operands and the approximate reciprocal in the sigmoid).
    ref = attention_gate_reference(g, x, params)
    err = float(jnp.max(jnp.abs(out - ref)))
    assert err < 5e-2, f"max abs error vs reference: {err}"

    print("KERNEL_OK")
</pallas_src>

<mosaic_0001>
module attributes {stable_mosaic.version = 11 : i64} {
  func.func @_attention_gate_kernel(%arg0: i32, %arg1: memref<32x256xf32, #tpu.memory_space<vmem>>, %arg2: memref<32x256xf32, #tpu.memory_space<vmem>>, %arg3: memref<16x32xbf16, #tpu.memory_space<vmem>>, %arg4: memref<16x1xf32, #tpu.memory_space<vmem>>, %arg5: memref<16x32xbf16, #tpu.memory_space<vmem>>, %arg6: memref<16x1xf32, #tpu.memory_space<vmem>>, %arg7: memref<1x16xbf16, #tpu.memory_space<vmem>>, %arg8: memref<1x1xf32, #tpu.memory_space<vmem>>, %arg9: memref<32x256xf32, #tpu.memory_space<vmem>>) attributes {dimension_semantics = [#tpu.dimension_semantics<parallel>], iteration_bounds = array<i64: 2>, scalar_prefetch = 0 : i64, scratch_operands = 0 : i64, tpu.core_type = #tpu.core_type<tc>, window_params = [{transform_indices = @transform_0, window_bounds = array<i64: 32, 256>}, {transform_indices = @transform_1, window_bounds = array<i64: 32, 256>}, {pipeline_mode = #tpu.pipeline_mode<synchronous>, transform_indices = @transform_2, window_bounds = array<i64: 16, 32>}, {pipeline_mode = #tpu.pipeline_mode<synchronous>, transform_indices = @transform_3, window_bounds = array<i64: 16, 1>}, {pipeline_mode = #tpu.pipeline_mode<synchronous>, transform_indices = @transform_4, window_bounds = array<i64: 16, 32>}, {pipeline_mode = #tpu.pipeline_mode<synchronous>, transform_indices = @transform_5, window_bounds = array<i64: 16, 1>}, {pipeline_mode = #tpu.pipeline_mode<synchronous>, transform_indices = @transform_6, window_bounds = array<i64: 1, 16>}, {pipeline_mode = #tpu.pipeline_mode<synchronous>, transform_indices = @transform_7, window_bounds = array<i64: 1, 1>}, {transform_indices = @transform_8, window_bounds = array<i64: 32, 256>}]} {
    %c0 = arith.constant 0 : index
    %c0_0 = arith.constant 0 : index
    %0 = vector.load %arg2[%c0, %c0_0] : memref<32x256xf32, #tpu.memory_space<vmem>>, vector<32x256xf32>
    %c0_1 = arith.constant 0 : index
    %c0_2 = arith.constant 0 : index
    %1 = vector.load %arg3[%c0_1, %c0_2] : memref<16x32xbf16, #tpu.memory_space<vmem>>, vector<16x32xbf16>
    %c0_3 = arith.constant 0 : index
    %c0_4 = arith.constant 0 : index
    %2 = vector.load %arg1[%c0_3, %c0_4] : memref<32x256xf32, #tpu.memory_space<vmem>>, vector<32x256xf32>
    %3 = arith.truncf %2 : vector<32x256xf32> to vector<32x256xbf16>
    %cst = arith.constant dense<0.000000e+00> : vector<16x256xf32>
    %4 = tpu.matmul %1, %3, %cst {dimension_numbers = #tpu.dot_dimension_numbers<[1], [0], [0], [1], [0, 0, 1, 1], [], []>} : vector<16x32xbf16>, vector<32x256xbf16>, vector<16x256xf32> -> vector<16x256xf32>
    %c0_5 = arith.constant 0 : index
    %c0_6 = arith.constant 0 : index
    %5 = vector.load %arg4[%c0_5, %c0_6] : memref<16x1xf32, #tpu.memory_space<vmem>>, vector<16x1xf32>
    %6 = vector.broadcast %5 : vector<16x1xf32> to vector<16x256xf32>
    %7 = arith.addf %4, %6 : vector<16x256xf32>
    %c0_7 = arith.constant 0 : index
    %c0_8 = arith.constant 0 : index
    %8 = vector.load %arg5[%c0_7, %c0_8] : memref<16x32xbf16, #tpu.memory_space<vmem>>, vector<16x32xbf16>
    %9 = arith.truncf %0 : vector<32x256xf32> to vector<32x256xbf16>
    %cst_9 = arith.constant dense<0.000000e+00> : vector<16x256xf32>
    %10 = tpu.matmul %8, %9, %cst_9 {dimension_numbers = #tpu.dot_dimension_numbers<[1], [0], [0], [1], [0, 0, 1, 1], [], []>} : vector<16x32xbf16>, vector<32x256xbf16>, vector<16x256xf32> -> vector<16x256xf32>
    %c0_10 = arith.constant 0 : index
    %c0_11 = arith.constant 0 : index
    %11 = vector.load %arg6[%c0_10, %c0_11] : memref<16x1xf32, #tpu.memory_space<vmem>>, vector<16x1xf32>
    %12 = vector.broadcast %11 : vector<16x1xf32> to vector<16x256xf32>
    %13 = arith.addf %10, %12 : vector<16x256xf32>
    %14 = arith.addf %7, %13 : vector<16x256xf32>
    %cst_12 = arith.constant 5.000000e-01 : f32
    %15 = vector.broadcast %cst_12 : f32 to vector<16x256xf32>
    %16 = arith.mulf %15, %14 : vector<16x256xf32>
    %cst_13 = arith.constant 4.471500e-02 : f32
    %17 = vector.broadcast %cst_13 : f32 to vector<16x256xf32>
    %18 = arith.mulf %17, %14 : vector<16x256xf32>
    %19 = arith.mulf %18, %14 : vector<16x256xf32>
    %20 = arith.mulf %19, %14 : vector<16x256xf32>
    %21 = arith.addf %14, %20 : vector<16x256xf32>
    %cst_14 = arith.constant 0.797884583 : f32
    %22 = vector.broadcast %cst_14 : f32 to vector<16x256xf32>
    %23 = arith.mulf %22, %21 : vector<16x256xf32>
    %24 = math.tanh %23 : vector<16x256xf32>
    %cst_15 = arith.constant 1.000000e+00 : f32
    %25 = vector.broadcast %cst_15 : f32 to vector<16x256xf32>
    %26 = arith.addf %25, %24 : vector<16x256xf32>
    %27 = arith.mulf %16, %26 : vector<16x256xf32>
    %c0_16 = arith.constant 0 : index
    %c0_17 = arith.constant 0 : index
    %28 = vector.load %arg7[%c0_16, %c0_17] : memref<1x16xbf16, #tpu.memory_space<vmem>>, vector<1x16xbf16>
    %29 = arith.truncf %27 : vector<16x256xf32> to vector<16x256xbf16>
    %cst_18 = arith.constant dense<0.000000e+00> : vector<1x256xf32>
    %30 = tpu.matmul %28, %29, %cst_18 {dimension_numbers = #tpu.dot_dimension_numbers<[1], [0], [0], [1], [0, 0, 1, 1], [], []>} : vector<1x16xbf16>, vector<16x256xbf16>, vector<1x256xf32> -> vector<1x256xf32>
    %c0_19 = arith.constant 0 : index
    %c0_20 = arith.constant 0 : index
    %31 = vector.load %arg8[%c0_19, %c0_20] : memref<1x1xf32, #tpu.memory_space<vmem>>, vector<1x1xf32>
    %32 = vector.broadcast %31 : vector<1x1xf32> to vector<1x256xf32>
    %33 = arith.addf %30, %32 : vector<1x256xf32>
    %cst_21 = arith.constant 0.000000e+00 : f32
    %34 = vector.broadcast %cst_21 : f32 to vector<1x256xf32>
    %35 = arith.subf %34, %33 : vector<1x256xf32>
    %36 = math.exp %35 : vector<1x256xf32>
    %cst_22 = arith.constant 1.000000e+00 : f32
    %37 = vector.broadcast %cst_22 : f32 to vector<1x256xf32>
    %38 = arith.addf %37, %36 : vector<1x256xf32>
    %39 = tpu.reciprocal %38 {approx = true} : vector<1x256xf32> -> vector<1x256xf32>
    %40 = vector.broadcast %39 : vector<1x256xf32> to vector<32x256xf32>
    %41 = arith.mulf %0, %40 : vector<32x256xf32>
    %c0_23 = arith.constant 0 : index
    %c0_24 = arith.constant 0 : index
    %42 = vector.load %arg9[%c0_23, %c0_24] : memref<32x256xf32, #tpu.memory_space<vmem>>, vector<32x256xf32>
    tpu.vector_store %arg9[%c0_23, %c0_24], %41 {strides = array<i32>} : memref<32x256xf32, #tpu.memory_space<vmem>>, vector<32x256xf32>,
    return
  }
  func.func @transform_0(%arg0: i32) -> (i32, i32) {
    %c0_i32 = arith.constant 0 : i32
    %c0_i32_0 = arith.constant 0 : i32
    return %c0_i32, %arg0 : i32, i32
  }
  func.func @transform_1(%arg0: i32) -> (i32, i32) {
    %c0_i32 = arith.constant 0 : i32
    %c0_i32_0 = arith.constant 0 : i32
    return %c0_i32, %arg0 : i32, i32
  }
  func.func @transform_2(%arg0: i32) -> (i32, i32) {
    %c0_i32 = arith.constant 0 : i32
    %c0_i32_0 = arith.constant 0 : i32
    %c0_i32_1 = arith.constant 0 : i32
    return %c0_i32, %c0_i32_0 : i32, i32
  }
  func.func @transform_3(%arg0: i32) -> (i32, i32) {
    %c0_i32 = arith.constant 0 : i32
    %c0_i32_0 = arith.constant 0 : i32
    %c0_i32_1 = arith.constant 0 : i32
    return %c0_i32, %c0_i32_0 : i32, i32
  }
  func.func @transform_4(%arg0: i32) -> (i32, i32) {
    %c0_i32 = arith.constant 0 : i32
    %c0_i32_0 = arith.constant 0 : i32
    %c0_i32_1 = arith.constant 0 : i32
    return %c0_i32, %c0_i32_0 : i32, i32
  }
  func.func @transform_5(%arg0: i32) -> (i32, i32) {
    %c0_i32 = arith.constant 0 : i32
    %c0_i32_0 = arith.constant 0 : i32
    %c0_i32_1 = arith.constant 0 : i32
    return %c0_i32, %c0_i32_0 : i32, i32
  }
  func.func @transform_6(%arg0: i32) -> (i32, i32) {
    %c0_i32 = arith.constant 0 : i32
    %c0_i32_0 = arith.constant 0 : i32
    %c0_i32_1 = arith.constant 0 : i32
    return %c0_i32, %c0_i32_0 : i32, i32
  }
  func.func @transform_7(%arg0: i32) -> (i32, i32) {
    %c0_i32 = arith.constant 0 : i32
    %c0_i32_0 = arith.constant 0 : i32
    %c0_i32_1 = arith.constant 0 : i32
    return %c0_i32, %c0_i32_0 : i32, i32
  }
  func.func @transform_8(%arg0: i32) -> (i32, i32) {
    %c0_i32 = arith.constant 0 : i32
    %c0_i32_0 = arith.constant 0 : i32
    return %c0_i32, %arg0 : i32, i32
  }
}

</mosaic_0001>

<llo_original>
// kernel: attention_gate_forward.1
$region0: #{attention_gate_forward.1}
  #allocation0 [shape = 'u32[]', space=smem, size = 0x4, offset = 0x4, fixed_abs, tag = 'smem constant byte address 0x4 - core index']
  #allocation1 [shape = 'u32[72,128]{1,0:T(1,128)}', space=vmem, size = 0x9000, scoped, tag = 'internal scratch']
  #allocation2 [shape = 'f32[1,1]{1,0:T(1,128)S(1)}', space=vmem, size = 0x200, scoped, tag = 'scoped memory for attention_gate_forward.1']
  %s0 = inlined_call_operand.vmem [shape: f32[32,512], index: 0, kind: input, shape index: {}]
  %s1 = inlined_call_operand.vmem [shape: f32[32,512], index: 1, kind: input, shape index: {}]
  %s2 = inlined_call_operand.vmem [shape: bf16[16,32], index: 2, kind: input, shape index: {}]
  %s3 = inlined_call_operand.vmem [shape: f32[16,1], index: 3, kind: input, shape index: {}]
  %s4 = inlined_call_operand.vmem [shape: bf16[16,32], index: 4, kind: input, shape index: {}]
  %s5 = inlined_call_operand.vmem [shape: f32[16,1], index: 5, kind: input, shape index: {}]
  %s6 = inlined_call_operand.vmem [shape: bf16[1,16], index: 6, kind: input, shape index: {}]
  %s7 = inlined_call_operand.<no memory space> [shape: f32[1,1], index: 7, kind: input, shape index: {}]
  %s8 = inlined_call_operand.vmem [shape: f32[32,512], index: 8, kind: output, shape index: {}]
  %s9 = sld [smem:[#allocation0]]
  $region130: #{attention_gate_forward.1} parent=0
    _
  %s11 = ssub.s32 1, %s9
  %s12 = scalar_select 0, %s11, %s9
  %v13 = vstv %s7
  %14 = vst [vmem:[#allocation2] sm:$0x1] %v13
  $region1: #{attention_gate_forward.1} parent=0
    #allocation3 [shape = 'u8[65536]{0}', space=vmem, size = 0x10000, scoped, tag = 'input window, operand 0']
    #allocation4 [shape = 'u8[65536]{0}', space=vmem, size = 0x10000, scoped, tag = 'input window, operand 1']
    #allocation5 [shape = 'u8[65536]{0}', space=vmem, size = 0x10000, scoped, tag = 'output window, operand 0']
    loop: start=0, step=1, limit=4
    $region2: #{attention_gate_forward.1} parent=1 // loop_pre_header
      _
    $region3: #{attention_gate_forward.1} parent=1 // loop_header
      %s16 = sphi 0, %s20
      %p17 = scmp.ge.s32.totalorder %s16, 4
      %s26 = sphi 0, %s28
      %s29 = sphi 0, %s26
      %s30 = sphi 0, %s29
      %s46 = sphi 0, %s30
      %s52 = sphi 0, %s54
      %s55 = sphi 0, %s52
      %s56 = sphi 0, %s55
      %s72 = sphi 0, %s56
      %s76 = sphi 0, %s76
      %s78 = sphi 0, %s76
      %s79 = sphi 0, %s78
      %s93 = sphi 0, %s79
      %s97 = sphi 0, %s97
      %s99 = sphi 0, %s97
      %s100 = sphi 0, %s99
      %s114 = sphi 0, %s100
      %s118 = sphi 0, %s118
      %s120 = sphi 0, %s118
      %s121 = sphi 0, %s120
      %s135 = sphi 0, %s121
      %s139 = sphi 0, %s139
      %s141 = sphi 0, %s139
      %s142 = sphi 0, %s141
      %s156 = sphi 0, %s142
      %s160 = sphi 0, %s160
      %s162 = sphi 0, %s160
      %s163 = sphi 0, %s162
      %s177 = sphi 0, %s163
      %s181 = sphi 0, %s181
      %s183 = sphi 0, %s181
      %s184 = sphi 0, %s183
      %s198 = sphi 0, %s184
      %s204 = sphi 0, %s206
      %s207 = sphi 0, %s204
      %s208 = sphi 0, %s207
      %s224 = sphi 0, %s208
    $region4: #{attention_gate_forward.1} parent=1 // loop_header_branch
      %19 = sbr.rel (%p17) target = $region8
    $region5: #{attention_gate_forward.1} parent=1 // loop_body
      %s21 = ssub.s32 %s16, 1
      %s22 = ssub.s32 %s16, 2
      %s23 = sadd.s32 %s16, 1
      %s24 = ssub.s32 %s16, %s23
      %p25 = scmp.eq.s32.totalorder %s24, 0
      %s27 = sadd.s32 %s26, 1
      %s28 = scalar_select %p25, %s26, %s27
      %p31 = pneg %p25
      %p32 = scmp.eq.s32.totalorder %s16, 1
      %p33 = por %p31, %p32
      %p34 = scmp.ne.s32.totalorder %s26, %s29
      %p35 = scmp.eq.s32.totalorder %s16, 0
      %p36 = por %p34, %p35
      %p37 = scmp.ne.s32.totalorder %s26, %s29
      %p38 = scmp.eq.s32.totalorder %s21, 1
      %p39 = por %p37, %p38
      %p40 = scmp.ne.s32.totalorder %s29, %s30
      %p41 = scmp.eq.s32.totalorder %s21, 0
      %p42 = por %p40, %p41
      %p43 = scmp.ne.s32.totalorder %s29, %s30
      %p44 = scmp.eq.s32.totalorder %s22, 1
      %p45 = por %p43, %p44
      %p47 = scmp.ne.s32.totalorder %s30, %s46
      %p48 = scmp.eq.s32.totalorder %s22, 0
      %p49 = por %p47, %p48
      %s50 = ssub.s32 %s16, %s23
      %p51 = scmp.eq.s32.totalorder %s50, 0
      %s53 = sadd.s32 %s52, 1
      %s54 = scalar_select %p51, %s52, %s53
      %p57 = pneg %p51
      %p58 = scmp.eq.s32.totalorder %s16, 1
      %p59 = por %p57, %p58
      %p60 = scmp.ne.s32.totalorder %s52, %s55
      %p61 = scmp.eq.s32.totalorder %s16, 0
      %p62 = por %p60, %p61
      %p63 = scmp.ne.s32.totalorder %s52, %s55
      %p64 = scmp.eq.s32.totalorder %s21, 1
      %p65 = por %p63, %p64
      %p66 = scmp.ne.s32.totalorder %s55, %s56
      %p67 = scmp.eq.s32.totalorder %s21, 0
      %p68 = por %p66, %p67
      %p69 = scmp.ne.s32.totalorder %s55, %s56
      %p70 = scmp.eq.s32.totalorder %s22, 1
      %p71 = por %p69, %p70
      %p73 = scmp.ne.s32.totalorder %s56, %s72
      %p74 = scmp.eq.s32.totalorder %s22, 0
      %p75 = por %p73, %p74
      %s77 = sadd.s32 %s76, 1
      %p80 = scmp.eq.s32.totalorder %s16, 1
      %p81 = scmp.ne.s32.totalorder %s76, %s78
      %p82 = scmp.eq.s32.totalorder %s16, 0
      %p83 = por %p81, %p82
      %p84 = scmp.ne.s32.totalorder %s76, %s78
      %p85 = scmp.eq.s32.totalorder %s21, 1
      %p86 = por %p84, %p85
      %p87 = scmp.ne.s32.totalorder %s78, %s79
      %p88 = scmp.eq.s32.totalorder %s21, 0
      %p89 = por %p87, %p88
      %p90 = scmp.ne.s32.totalorder %s78, %s79
      %p91 = scmp.eq.s32.totalorder %s22, 1
      %p92 = por %p90, %p91
      %p94 = scmp.ne.s32.totalorder %s79, %s93
      %p95 = scmp.eq.s32.totalorder %s22, 0
      %p96 = por %p94, %p95
      %s98 = sadd.s32 %s97, 1
      %p101 = scmp.eq.s32.totalorder %s16, 1
      %p102 = scmp.ne.s32.totalorder %s97, %s99
      %p103 = scmp.eq.s32.totalorder %s16, 0
      %p104 = por %p102, %p103
      %p105 = scmp.ne.s32.totalorder %s97, %s99
      %p106 = scmp.eq.s32.totalorder %s21, 1
      %p107 = por %p105, %p106
      %p108 = scmp.ne.s32.totalorder %s99, %s100
      %p109 = scmp.eq.s32.totalorder %s21, 0
      %p110 = por %p108, %p109
      %p111 = scmp.ne.s32.totalorder %s99, %s100
      %p112 = scmp.eq.s32.totalorder %s22, 1
      %p113 = por %p111, %p112
      %p115 = scmp.ne.s32.totalorder %s100, %s114
      %p116 = scmp.eq.s32.totalorder %s22, 0
      %p117 = por %p115, %p116
      %s119 = sadd.s32 %s118, 1
      %p122 = scmp.eq.s32.totalorder %s16, 1
      %p123 = scmp.ne.s32.totalorder %s118, %s120
      %p124 = scmp.eq.s32.totalorder %s16, 0
      %p125 = por %p123, %p124
      %p126 = scmp.ne.s32.totalorder %s118, %s120
      %p127 = scmp.eq.s32.totalorder %s21, 1
      %p128 = por %p126, %p127
      %p129 = scmp.ne.s32.totalorder %s120, %s121
      %p130 = scmp.eq.s32.totalorder %s21, 0
      %p131 = por %p129, %p130
      %p132 = scmp.ne.s32.totalorder %s120, %s121
      %p133 = scmp.eq.s32.totalorder %s22, 1
      %p134 = por %p132, %p133
      %p136 = scmp.ne.s32.totalorder %s121, %s135
      %p137 = scmp.eq.s32.totalorder %s22, 0
      %p138 = por %p136, %p137
      %s140 = sadd.s32 %s139, 1
      %p143 = scmp.eq.s32.totalorder %s16, 1
      %p144 = scmp.ne.s32.totalorder %s139, %s141
      %p145 = scmp.eq.s32.totalorder %s16, 0
      %p146 = por %p144, %p145
      %p147 = scmp.ne.s32.totalorder %s139, %s141
      %p148 = scmp.eq.s32.totalorder %s21, 1
      %p149 = por %p147, %p148
      %p150 = scmp.ne.s32.totalorder %s141, %s142
      %p151 = scmp.eq.s32.totalorder %s21, 0
      %p152 = por %p150, %p151
      %p153 = scmp.ne.s32.totalorder %s141, %s142
      %p154 = scmp.eq.s32.totalorder %s22, 1
      %p155 = por %p153, %p154
      %p157 = scmp.ne.s32.totalorder %s142, %s156
      %p158 = scmp.eq.s32.totalorder %s22, 0
      %p159 = por %p157, %p158
      %s161 = sadd.s32 %s160, 1
      %p164 = scmp.eq.s32.totalorder %s16, 1
      %p165 = scmp.ne.s32.totalorder %s160, %s162
      %p166 = scmp.eq.s32.totalorder %s16, 0
      %p167 = por %p165, %p166
      %p168 = scmp.ne.s32.totalorder %s160, %s162
      %p169 = scmp.eq.s32.totalorder %s21, 1
      %p170 = por %p168, %p169
      %p171 = scmp.ne.s32.totalorder %s162, %s163
      %p172 = scmp.eq.s32.totalorder %s21, 0
      %p173 = por %p171, %p172
      %p174 = scmp.ne.s32.totalorder %s162, %s163
      %p175 = scmp.eq.s32.totalorder %s22, 1
      %p176 = por %p174, %p175
      %p178 = scmp.ne.s32.totalorder %s163, %s177
      %p179 = scmp.eq.s32.totalorder %s22, 0
      %p180 = por %p178, %p179
      %s182 = sadd.s32 %s181, 1
      %p185 = scmp.eq.s32.totalorder %s16, 1
      %p186 = scmp.ne.s32.totalorder %s181, %s183
      %p187 = scmp.eq.s32.totalorder %s16, 0
      %p188 = por %p186, %p187
      %p189 = scmp.ne.s32.totalorder %s181, %s183
      %p190 = scmp.eq.s32.totalorder %s21, 1
      %p191 = por %p189, %p190
      %p192 = scmp.ne.s32.totalorder %s183, %s184
      %p193 = scmp.eq.s32.totalorder %s21, 0
      %p194 = por %p192, %p193
      %p195 = scmp.ne.s32.totalorder %s183, %s184
      %p196 = scmp.eq.s32.totalorder %s22, 1
      %p197 = por %p195, %p196
      %p199 = scmp.ne.s32.totalorder %s184, %s198
      %p200 = scmp.eq.s32.totalorder %s22, 0
      %p201 = por %p199, %p200
      %s202 = ssub.s32 %s16, %s23
      %p203 = scmp.eq.s32.totalorder %s202, 0
      %s205 = sadd.s32 %s204, 1
      %s206 = scalar_select %p203, %s204, %s205
      %p209 = pneg %p203
      %p210 = scmp.eq.s32.totalorder %s16, 1
      %p211 = por %p209, %p210
      %p212 = scmp.ne.s32.totalorder %s204, %s207
      %p213 = scmp.eq.s32.totalorder %s16, 0
      %p214 = por %p212, %p213
      %p215 = scmp.ne.s32.totalorder %s204, %s207
      %p216 = scmp.eq.s32.totalorder %s21, 1
      %p217 = por %p215, %p216
      %p218 = scmp.ne.s32.totalorder %s207, %s208
      %p219 = scmp.eq.s32.totalorder %s21, 0
      %p220 = por %p218, %p219
      %p221 = scmp.ne.s32.totalorder %s207, %s208
      %p222 = scmp.eq.s32.totalorder %s22, 1
      %p223 = por %p221, %p222
      %p225 = scmp.ne.s32.totalorder %s208, %s224
      %p226 = scmp.eq.s32.totalorder %s22, 0
      %p227 = por %p225, %p226
      %p228 = scmp.le.s32.totalorder 1, %s16
      %p229 = scmp.lt.s32.totalorder %s16, 3
      %p230 = pnand %p228, %p229
      %p231 = pneg %p230
      // Predicated region
      $region9: #{attention_gate_forward.1} parent=5 // pred_check
        _
      $region10: #{attention_gate_forward.1} parent=5 // pred_check_branch
        %233 = sbr.rel (%p230) target = $region12
      $region11: #{attention_gate_forward.1} parent=5 // pred_region
        %s234 = ssub.s32 %s16, 1
        // Predicated region
        $region13: #{attention_gate_forward.1} parent=11 // pred_check
          %p235 = pneg %p89
        $region14: #{attention_gate_forward.1} parent=11 // pred_check_branch
          %237 = sbr.rel (%p235) target = $region16
        $region15: #{attention_gate_forward.1} parent=11 // pred_region
          _
        $region16: #{attention_gate_forward.1} parent=11 // pred_fallthru
          _
        // Predicated region
        $region17: #{attention_gate_forward.1} parent=11 // pred_check
          %p238 = pneg %p110
        $region18: #{attention_gate_forward.1} parent=11 // pred_check_branch
          %240 = sbr.rel (%p238) target = $region20
        $region19: #{attention_gate_forward.1} parent=11 // pred_region
          _
        $region20: #{attention_gate_forward.1} parent=11 // pred_fallthru
          _
        // Predicated region
        $region21: #{attention_gate_forward.1} parent=11 // pred_check
          %p241 = pneg %p131
        $region22: #{attention_gate_forward.1} parent=11 // pred_check_branch
          %243 = sbr.rel (%p241) target = $region24
        $region23: #{attention_gate_forward.1} parent=11 // pred_region
          _
        $region24: #{attention_gate_forward.1} parent=11 // pred_fallthru
          _
        // Predicated region
        $region25: #{attention_gate_forward.1} parent=11 // pred_check
          %p244 = pneg %p152
        $region26: #{attention_gate_forward.1} parent=11 // pred_check_branch
          %246 = sbr.rel (%p244) target = $region28
        $region27: #{attention_gate_forward.1} parent=11 // pred_region
          _
        $region28: #{attention_gate_forward.1} parent=11 // pred_fallthru
          _
        // Predicated region
        $region29: #{attention_gate_forward.1} parent=11 // pred_check
          %p247 = pneg %p173
        $region30: #{attention_gate_forward.1} parent=11 // pred_check_branch
          %249 = sbr.rel (%p247) target = $region32
        $region31: #{attention_gate_forward.1} parent=11 // pred_region
          _
        $region32: #{attention_gate_forward.1} parent=11 // pred_fallthru
          _
        // Predicated region
        $region33: #{attention_gate_forward.1} parent=11 // pred_check
          %p250 = pneg %p194
        $region34: #{attention_gate_forward.1} parent=11 // pred_check_branch
          %252 = sbr.rel (%p250) target = $region36
        $region35: #{attention_gate_forward.1} parent=11 // pred_region
          _
        $region36: #{attention_gate_forward.1} parent=11 // pred_fallthru
          _
      $region12: #{attention_gate_forward.1} parent=5 // pred_fallthru
        _
      %p253 = scmp.lt.s32.totalorder %s16, 2
      // Predicated region
      $region37: #{attention_gate_forward.1} parent=5 // pred_check
        %p254 = pneg %p253
      $region38: #{attention_gate_forward.1} parent=5 // pred_check_branch
        %256 = sbr.rel (%p254) target = $region40
      $region39: #{attention_gate_forward.1} parent=5 // pred_region
        // Predicated region
        $region41: #{attention_gate_forward.1} parent=39 // pred_check
          %p257 = pneg %p36
        $region42: #{attention_gate_forward.1} parent=39 // pred_check_branch
          %259 = sbr.rel (%p257) target = $region44
        $region43: #{attention_gate_forward.1} parent=39 // pred_region
          %s260 = sand.u32 %s26, 1
          %s261 = sand.u32 %s26, 1
          %s262 = smul.addr %s261, 64
          %s263 = scalar_lea.vmem [#allocation3], %s262
          %s264 = smul.u32 2, %s16
          %s265 = smul.addr %s264, 8
          %s266 = scalar_lea.vmem %s0, %s265
          // Predicated region
          $region45: #{attention_gate_forward.1} parent=43 // pred_check
            _
          $region46: #{attention_gate_forward.1} parent=43 // pred_check_branch
            %268 = sbr.rel (0) target = $region48
          $region47: #{attention_gate_forward.1} parent=43 // pred_region
            // Predicated region
            $region49: #{attention_gate_forward.1} parent=47 // pred_check
              _
            $region50: #{attention_gate_forward.1} parent=47 // pred_check_branch
              %270 = sbr.rel (0) target = $region52
            $region51: #{attention_gate_forward.1} parent=47 // pred_region
              loop: start=0, step=1, limit=1
              $region53: #{attention_gate_forward.1} parent=51 // loop_pre_header
                _
              $region54: #{attention_gate_forward.1} parent=51 // loop_header
                %s272 = sphi 0, %s276
                %p273 = scmp.ge.s32.totalorder %s272, 1
                %s277 = sphi %s266, %s266
                %s278 = sphi %s263, %s263
              $region55: #{attention_gate_forward.1} parent=51 // loop_header_branch
                %275 = sbr.rel (%p273) target = $region59
              $region56: #{attention_gate_forward.1} parent=51 // loop_body
                %v279 = vld [vmem:[%s277] sm:$0xff]
                %280 = vst [vmem:[%s278] sm:$0xff] %v279
                %v281 = vld [vmem:[%s277 + $0x8] sm:$0xff]
                %282 = vst [vmem:[%s278 + $0x8] sm:$0xff] %v281
                %v283 = vld [vmem:[%s277 + $0x20] sm:$0xff]
                %284 = vst [vmem:[%s278 + $0x10] sm:$0xff] %v283
                %v285 = vld [vmem:[%s277 + $0x28] sm:$0xff]
                %286 = vst [vmem:[%s278 + $0x18] sm:$0xff] %v285
                %v287 = vld [vmem:[%s277 + $0x40] sm:$0xff]
                %288 = vst [vmem:[%s278 + $0x20] sm:$0xff] %v287
                %v289 = vld [vmem:[%s277 + $0x48] sm:$0xff]
                %290 = vst [vmem:[%s278 + $0x28] sm:$0xff] %v289
                %v291 = vld [vmem:[%s277 + $0x60] sm:$0xff]
                %292 = vst [vmem:[%s278 + $0x30] sm:$0xff] %v291
                %v293 = vld [vmem:[%s277 + $0x68] sm:$0xff]
                %294 = vst [vmem:[%s278 + $0x38] sm:$0xff] %v293
              $region57: #{attention_gate_forward.1} parent=51 // loop_footer
                %s276 = sadd.s32 1, %s272
              $region58: #{attention_gate_forward.1} parent=51 // loop_footer_branch
                %271 = sbr.rel target = $region54
              $region59: #{attention_gate_forward.1} parent=51 // loop_exit
                _
            $region52: #{attention_gate_forward.1} parent=47 // pred_fallthru
              _
            // Predicated region
            $region60: #{attention_gate_forward.1} parent=47 // pred_check
              _
            $region61: #{attention_gate_forward.1} parent=47 // pred_check_branch
              %296 = sbr.rel target = $region63
            $region62: #{attention_gate_forward.1} parent=47 // pred_region
              _
            $region63: #{attention_gate_forward.1} parent=47 // pred_fallthru
              _
          $region48: #{attention_gate_forward.1} parent=43 // pred_fallthru
            _
          %297 = vnop
        $region44: #{attention_gate_forward.1} parent=39 // pred_fallthru
          _
        // Predicated region
        $region64: #{attention_gate_forward.1} parent=39 // pred_check
          %p298 = pneg %p62
        $region65: #{attention_gate_forward.1} parent=39 // pred_check_branch
          %300 = sbr.rel (%p298) target = $region67
        $region66: #{attention_gate_forward.1} parent=39 // pred_region
          %s301 = sand.u32 %s52, 1
          %s302 = sand.u32 %s52, 1
          %s303 = smul.addr %s302, 64
          %s304 = scalar_lea.vmem [#allocation4], %s303
          %s305 = smul.u32 2, %s16
          %s306 = smul.addr %s305, 8
          %s307 = scalar_lea.vmem %s1, %s306
          // Predicated region
          $region68: #{attention_gate_forward.1} parent=66 // pred_check
            _
          $region69: #{attention_gate_forward.1} parent=66 // pred_check_branch
            %309 = sbr.rel (0) target = $region71
          $region70: #{attention_gate_forward.1} parent=66 // pred_region
            // Predicated region
            $region72: #{attention_gate_forward.1} parent=70 // pred_check
              _
            $region73: #{attention_gate_forward.1} parent=70 // pred_check_branch
              %311 = sbr.rel (0) target = $region75
            $region74: #{attention_gate_forward.1} parent=70 // pred_region
              loop: start=0, step=1, limit=1
              $region76: #{attention_gate_forward.1} parent=74 // loop_pre_header
                _
              $region77: #{attention_gate_forward.1} parent=74 // loop_header
                %s313 = sphi 0, %s317
                %p314 = scmp.ge.s32.totalorder %s313, 1
                %s318 = sphi %s307, %s307
                %s319 = sphi %s304, %s304
              $region78: #{attention_gate_forward.1} parent=74 // loop_header_branch
                %316 = sbr.rel (%p314) target = $region82
              $region79: #{attention_gate_forward.1} parent=74 // loop_body
                %v320 = vld [vmem:[%s318] sm:$0xff]
                %321 = vst [vmem:[%s319] sm:$0xff] %v320
                %v322 = vld [vmem:[%s318 + $0x8] sm:$0xff]
                %323 = vst [vmem:[%s319 + $0x8] sm:$0xff] %v322
                %v324 = vld [vmem:[%s318 + $0x20] sm:$0xff]
                %325 = vst [vmem:[%s319 + $0x10] sm:$0xff] %v324
                %v326 = vld [vmem:[%s318 + $0x28] sm:$0xff]
                %327 = vst [vmem:[%s319 + $0x18] sm:$0xff] %v326
                %v328 = vld [vmem:[%s318 + $0x40] sm:$0xff]
                %329 = vst [vmem:[%s319 + $0x20] sm:$0xff] %v328
                %v330 = vld [vmem:[%s318 + $0x48] sm:$0xff]
                %331 = vst [vmem:[%s319 + $0x28] sm:$0xff] %v330
                %v332 = vld [vmem:[%s318 + $0x60] sm:$0xff]
                %333 = vst [vmem:[%s319 + $0x30] sm:$0xff] %v332
                %v334 = vld [vmem:[%s318 + $0x68] sm:$0xff]
                %335 = vst [vmem:[%s319 + $0x38] sm:$0xff] %v334
              $region80: #{attention_gate_forward.1} parent=74 // loop_footer
                %s317 = sadd.s32 1, %s313
              $region81: #{attention_gate_forward.1} parent=74 // loop_footer_branch
                %312 = sbr.rel target = $region77
              $region82: #{attention_gate_forward.1} parent=74 // loop_exit
                _
            $region75: #{attention_gate_forward.1} parent=70 // pred_fallthru
              _
            // Predicated region
            $region83: #{attention_gate_forward.1} parent=70 // pred_check
              _
            $region84: #{attention_gate_forward.1} parent=70 // pred_check_branch
              %337 = sbr.rel target = $region86
            $region85: #{attention_gate_forward.1} parent=70 // pred_region
              _
            $region86: #{attention_gate_forward.1} parent=70 // pred_fallthru
              _
          $region71: #{attention_gate_forward.1} parent=66 // pred_fallthru
            _
          %338 = vnop
        $region67: #{attention_gate_forward.1} parent=39 // pred_fallthru
          _
      $region40: #{attention_gate_forward.1} parent=5 // pred_fallthru
        _
      %p339 = scmp.le.s32.totalorder 1, %s16
      %p340 = scmp.lt.s32.totalorder %s16, 3
      %p341 = pnand %p339, %p340
      %p342 = pneg %p341
      // Predicated region
      $region87: #{attention_gate_forward.1} parent=5 // pred_check
        _
      $region88: #{attention_gate_forward.1} parent=5 // pred_check_branch
        %344 = sbr.rel (%p341) target = $region90
      $region89: #{attention_gate_forward.1} parent=5 // pred_region
        %s345 = ssub.s32 %s16, 1
        %s346 = sand.u32 %s29, 1
        %s347 = sand.u32 %s29, 1
        %s348 = smul.addr %s347, 64
        %s349 = scalar_lea.vmem [#allocation3], %s348
        // Predicated region
        $region91: #{attention_gate_forward.1} parent=89 // pred_check
          %p350 = pneg %p42
        $region92: #{attention_gate_forward.1} parent=89 // pred_check_branch
          %352 = sbr.rel (%p350) target = $region94
        $region93: #{attention_gate_forward.1} parent=89 // pred_region
          _
        $region94: #{attention_gate_forward.1} parent=89 // pred_fallthru
          _
        %s353 = sand.u32 %s55, 1
        %s354 = sand.u32 %s55, 1
        %s355 = smul.addr %s354, 64
        %s356 = scalar_lea.vmem [#allocation4], %s355
        // Predicated region
        $region95: #{attention_gate_forward.1} parent=89 // pred_check
          %p357 = pneg %p68
        $region96: #{attention_gate_forward.1} parent=89 // pred_check_branch
          %359 = sbr.rel (%p357) target = $region98
        $region97: #{attention_gate_forward.1} parent=89 // pred_region
          _
        $region98: #{attention_gate_forward.1} parent=89 // pred_fallthru
          _
        %s360 = sand.u32 %s29, 1
        %s361 = sand.u32 %s29, 1
        %s362 = smul.addr %s361, 64
        %s363 = scalar_lea.vmem [#allocation3], %s362
        %p364 = pneg %p42
        %p365 = pneg %p39
        %s366 = sand.u32 %s55, 1
        %s367 = sand.u32 %s55, 1
        %s368 = smul.addr %s367, 64
        %s369 = scalar_lea.vmem [#allocation4], %s368
        %p370 = pneg %p68
        %p371 = pneg %p65
        %p372 = pneg %p89
        %p373 = pneg %p86
        %p374 = pneg %p110
        %p375 = pneg %p107
        %p376 = pneg %p131
        %p377 = pneg %p128
        %p378 = pneg %p152
        %p379 = pneg %p149
        %p380 = pneg %p173
        %p381 = pneg %p170
        %p382 = pneg %p194
        %p383 = pneg %p191
        %p384 = pneg %p220
        %p385 = pneg %p217
        %s386 = sand.u32 %s207, 1
        %s387 = sand.u32 %s207, 1
        %s388 = smul.addr %s387, 64
        %s389 = scalar_lea.vmem [#allocation5], %s388
        %s390 = smul.u32 2, %s21
        %s391 = smul.u32 2, %s21
        %s392 = smul.u32 2, %s21
        %v394 = vld [vmem:[%s356] sm:$0xff]
        %v395 = vld [vmem:[%s356 + $0x8] sm:$0xff]
        %v396 = vld [vmem:[%s356 + $0x10] sm:$0xff]
        %v397 = vld [vmem:[%s356 + $0x18] sm:$0xff]
        %v398 = vld [vmem:[%s356 + $0x20] sm:$0xff]
        %v399 = vld [vmem:[%s356 + $0x28] sm:$0xff]
        %v400 = vld [vmem:[%s356 + $0x30] sm:$0xff]
        %v401 = vld [vmem:[%s356 + $0x38] sm:$0xff]
        %v402 = vld [vmem:[%s2] sm:$0xf]
        %v403 = vld [vmem:[%s2 + $0x4] sm:$0xf]
        %v404 = vld [vmem:[%s349] sm:$0xff]
        %v405 = vld [vmem:[%s349 + $0x8] sm:$0xff]
        %v406 = vld [vmem:[%s349 + $0x10] sm:$0xff]
        %v407 = vld [vmem:[%s349 + $0x18] sm:$0xff]
        %v408 = vld [vmem:[%s349 + $0x20] sm:$0xff]
        %v409 = vld [vmem:[%s349 + $0x28] sm:$0xff]
        %v410 = vld [vmem:[%s349 + $0x30] sm:$0xff]
        %v411 = vld [vmem:[%s349 + $0x38] sm:$0xff]
        %v412 = vpack.c.bf16 %v406, %v404
        %v413 = vpack.c.bf16 %v407, %v405
        %v414 = vpack.c.bf16 %v410, %v408
        %v415 = vpack.c.bf16 %v411, %v409
        %v416 = vld [vmem:[%s3] sm:$0xff]
        %v417 = vld [vmem:[%s3 + $0x8] sm:$0xff]
        %419 = vset.pattern.permute.xlu0 0
        %420 = vperm.xlu0 %419, %v416
        %v421 = vpop.permute.xlu0 %420
        %424 = vset.pattern.permute.xlu0 0
        %425 = vperm.xlu0 %424, %v417
        %v426 = vpop.permute.xlu0 %425
        %v430 = vunpack.c.l.b16 %v402
        %v431 = vunpack.c.l.b16 %v403
        %v432 = vpack.c.b16 %v431, %v430
        %vm433 = vcmask 261120
        %v435 = vsel %vm433, %v432, 0
        %437 = vmatpush.bf16.msra.mxu0 0
        %438 = vmatpush.bf16.msra.mxu0 0
        %439 = vmatpush.bf16.msra.mxu0 0
        %440 = vmatpush.bf16.msra.mxu0 0
        %441 = vmatpush.bf16.msra.mxu0 0
        %442 = vmatpush.bf16.msra.mxu0 0
        %443 = vmatpush.bf16.msra.mxu0 %v414
        %444 = vmatpush.bf16.msra.mxu0 %v412
        %445 = vmatmul.bf16.gmra.mxu0 %v435
        %v446 = vpop.f32.mrf.mxu0
        %v447 = vadd.f32 %v421, %v446
        %v448 = vpop.f32.mrf.mxu0
        %v449 = vadd.f32 %v426, %v448
        %450 = vdwg.mxu0
        %451 = vmatpush.bf16.msra.mxu0 0
        %452 = vmatpush.bf16.msra.mxu0 0
        %453 = vmatpush.bf16.msra.mxu0 0
        %454 = vmatpush.bf16.msra.mxu0 0
        %455 = vmatpush.bf16.msra.mxu0 0
        %456 = vmatpush.bf16.msra.mxu0 0
        %457 = vmatpush.bf16.msra.mxu0 %v415
        %458 = vmatpush.bf16.msra.mxu0 %v413
        %459 = vmatmul.bf16.gmra.mxu0 %v435
        %v460 = vpop.f32.mrf.mxu0
        %v461 = vadd.f32 %v421, %v460
        %v462 = vpop.f32.mrf.mxu0
        %v463 = vadd.f32 %v426, %v462
        %464 = vdwg.mxu0
        %v465 = vld [vmem:[%s4] sm:$0xf]
        %v466 = vld [vmem:[%s4 + $0x4] sm:$0xf]
        %v467 = vpack.c.bf16 %v396, %v394
        %v468 = vpack.c.bf16 %v397, %v395
        %v469 = vpack.c.bf16 %v400, %v398
        %v470 = vpack.c.bf16 %v401, %v399
        %v471 = vld [vmem:[%s5] sm:$0xff]
        %v472 = vld [vmem:[%s5 + $0x8] sm:$0xff]
        %474 = vset.pattern.permute.xlu0 0
        %475 = vperm.xlu0 %474, %v471
        %v476 = vpop.permute.xlu0 %475
        %479 = vset.pattern.permute.xlu0 0
        %480 = vperm.xlu0 %479, %v472
        %v481 = vpop.permute.xlu0 %480
        %v485 = vunpack.c.l.b16 %v465
        %v486 = vunpack.c.l.b16 %v466
        %v487 = vpack.c.b16 %v486, %v485
        %v489 = vsel %vm433, %v487, 0
        %491 = vmatpush.bf16.msra.mxu0 0
        %492 = vmatpush.bf16.msra.mxu0 0
        %493 = vmatpush.bf16.msra.mxu0 0
        %494 = vmatpush.bf16.msra.mxu0 0
        %495 = vmatpush.bf16.msra.mxu0 0
        %496 = vmatpush.bf16.msra.mxu0 0
        %497 = vmatpush.bf16.msra.mxu0 %v469
        %498 = vmatpush.bf16.msra.mxu0 %v467
        %499 = vmatmul.bf16.gmra.mxu0 %v489
        %v500 = vpop.f32.mrf.mxu0
        %v501 = vadd.f32 %v476, %v500
        %v502 = vpop.f32.mrf.mxu0
        %v503 = vadd.f32 %v481, %v502
        %504 = vdwg.mxu0
        %505 = vmatpush.bf16.msra.mxu0 0
        %506 = vmatpush.bf16.msra.mxu0 0
        %507 = vmatpush.bf16.msra.mxu0 0
        %508 = vmatpush.bf16.msra.mxu0 0
        %509 = vmatpush.bf16.msra.mxu0 0
        %510 = vmatpush.bf16.msra.mxu0 0
        %511 = vmatpush.bf16.msra.mxu0 %v470
        %512 = vmatpush.bf16.msra.mxu0 %v468
        %513 = vmatmul.bf16.gmra.mxu0 %v489
        %v514 = vpop.f32.mrf.mxu0
        %v515 = vadd.f32 %v476, %v514
        %v516 = vpop.f32.mrf.mxu0
        %v517 = vadd.f32 %v481, %v516
        %518 = vdwg.mxu0
        %v519 = vadd.f32 %v447, %v501
        %v520 = vadd.f32 %v461, %v515
        %v521 = vadd.f32 %v449, %v503
        %v522 = vadd.f32 %v463, %v517
        %v523 = vmul.f32 %v519, 0.5
        %v524 = vmul.f32 %v520, 0.5
        %v525 = vmul.f32 %v521, 0.5
        %v526 = vmul.f32 %v522, 0.5
        %v527 = vmul.f32 %v519, 0.044715
        %v528 = vmul.f32 %v520, 0.044715
        %v529 = vmul.f32 %v521, 0.044715
        %v530 = vmul.f32 %v522, 0.044715
        %v531 = vmul.f32 %v527, %v519
        %v532 = vmul.f32 %v528, %v520
        %v533 = vmul.f32 %v529, %v521
        %v534 = vmul.f32 %v530, %v522
        %v535 = vmul.f32 %v531, %v519
        %v536 = vmul.f32 %v532, %v520
        %v537 = vmul.f32 %v533, %v521
        %v538 = vmul.f32 %v534, %v522
        %v539 = vadd.f32 %v519, %v535
        %v540 = vadd.f32 %v520, %v536
        %v541 = vadd.f32 %v521, %v537
        %v542 = vadd.f32 %v522, %v538
        %v543 = vmul.f32 %v539, 0.7978846
        %v544 = vmul.f32 %v540, 0.7978846
        %v545 = vmul.f32 %v541, 0.7978846
        %v546 = vmul.f32 %v542, 0.7978846
        %v547 = vtanh.pop %v543
        %v548 = vtanh.pop %v544
        %v549 = vtanh.pop %v545
        %v550 = vtanh.pop %v546
        %v551 = vadd.f32 %v547, 1.0
        %v552 = vadd.f32 %v548, 1.0
        %v553 = vadd.f32 %v549, 1.0
        %v554 = vadd.f32 %v550, 1.0
        %v555 = vmul.f32 %v523, %v551
        %v556 = vmul.f32 %v524, %v552
        %v557 = vmul.f32 %v525, %v553
        %v558 = vmul.f32 %v526, %v554
        %v559 = vld [vmem:[%s6] sm:$0x1]
        %v560 = vpack.c.bf16 %v557, %v555
        %v561 = vpack.c.bf16 %v558, %v556
        %v562 = vld [vmem:[#allocation2] sm:$0x1]
        %564 = vset.pattern.permute.xlu0 0
        %565 = vperm.xlu0 %564, %v562
        %v566 = vpop.permute.xlu0 %565
        %v568 = vperm.slane %v566, 0
        %vm569 = vcmask 130048
        %v571 = vsel %vm569, %v559, 0
        %573 = vmatpush.bf16.msra.mxu0 0
        %574 = vmatpush.bf16.msra.mxu0 0
        %575 = vmatpush.bf16.msra.mxu0 0
        %576 = vmatpush.bf16.msra.mxu0 0
        %577 = vmatpush.bf16.msra.mxu0 0
        %578 = vmatpush.bf16.msra.mxu0 0
        %579 = vmatpush.bf16.msra.mxu0 0
        %580 = vmatpush.bf16.msra.mxu0 %v560
        %581 = vmatmul.bf16.gmra.mxu0 %v571
        %v582 = vpop.f32.mrf.mxu0
        %v583 = vadd.f32 %v568, %v582
        %v584 = vpop.f32.mrf.mxu0
        %585 = vdwg.mxu0
        %586 = vmatpush.bf16.msra.mxu0 0
        %587 = vmatpush.bf16.msra.mxu0 0
        %588 = vmatpush.bf16.msra.mxu0 0
        %589 = vmatpush.bf16.msra.mxu0 0
        %590 = vmatpush.bf16.msra.mxu0 0
        %591 = vmatpush.bf16.msra.mxu0 0
        %592 = vmatpush.bf16.msra.mxu0 0
        %593 = vmatpush.bf16.msra.mxu0 %v561
        %594 = vmatmul.bf16.gmra.mxu0 %v571
        %v595 = vpop.f32.mrf.mxu0
        %v596 = vadd.f32 %v568, %v595
        %v597 = vpop.f32.mrf.mxu0
        %598 = vdwg.mxu0
        %v599 = vsub.f32 0.0, %v583
        %v600 = vsub.f32 0.0, %v596
        %v601 = vmul.f32 %v599, 1.442695
        %v602 = vpow.pop %v601
        %v603 = vmul.f32 %v600, 1.442695
        %v604 = vpow.pop %v603
        %v605 = vadd.f32 %v602, 1.0
        %v606 = vadd.f32 %v604, 1.0
        %v607 = vrcp.pop %v605
        %v608 = vrcp.pop %v606
        %v609 = vperm.slane %v607, 0
        %v610 = vperm.slane %v608, 0
        %v611 = vmul.f32 %v394, %v609
        %v612 = vmul.f32 %v395, %v610
        %v613 = vmul.f32 %v396, %v609
        %v614 = vmul.f32 %v397, %v610
        %v615 = vmul.f32 %v398, %v609
        %v616 = vmul.f32 %v399, %v610
        %v617 = vmul.f32 %v400, %v609
        %v618 = vmul.f32 %v401, %v610
        %619 = vst [vmem:[%s389] sm:$0xff] %v611
        %620 = vst [vmem:[%s389 + $0x8] sm:$0xff] %v612
        %621 = vst [vmem:[%s389 + $0x10] sm:$0xff] %v613
        %622 = vst [vmem:[%s389 + $0x18] sm:$0xff] %v614
        %623 = vst [vmem:[%s389 + $0x20] sm:$0xff] %v615
        %624 = vst [vmem:[%s389 + $0x28] sm:$0xff] %v616
        %625 = vst [vmem:[%s389 + $0x30] sm:$0xff] %v617
        %626 = vst [vmem:[%s389 + $0x38] sm:$0xff] %v618
        %s627 = sand.u32 %s207, 1
        %s628 = sand.u32 %s207, 1
        %s629 = smul.addr %s628, 64
        %s630 = scalar_lea.vmem [#allocation5], %s629
        // Predicated region
        $region99: #{attention_gate_forward.1} parent=89 // pred_check
          %p631 = pneg %p217
        $region100: #{attention_gate_forward.1} parent=89 // pred_check_branch
          %633 = sbr.rel (%p631) target = $region102
        $region101: #{attention_gate_forward.1} parent=89 // pred_region
          %s634 = smul.u32 2, %s21
          %s635 = smul.addr %s634, 8
          %s636 = scalar_lea.vmem %s8, %s635
          // Predicated region
          $region103: #{attention_gate_forward.1} parent=101 // pred_check
            _
          $region104: #{attention_gate_forward.1} parent=101 // pred_check_branch
            %638 = sbr.rel (0) target = $region106
          $region105: #{attention_gate_forward.1} parent=101 // pred_region
            // Predicated region
            $region107: #{attention_gate_forward.1} parent=105 // pred_check
              _
            $region108: #{attention_gate_forward.1} parent=105 // pred_check_branch
              %640 = sbr.rel (0) target = $region110
            $region109: #{attention_gate_forward.1} parent=105 // pred_region
              loop: start=0, step=1, limit=1
              $region111: #{attention_gate_forward.1} parent=109 // loop_pre_header
                _
              $region112: #{attention_gate_forward.1} parent=109 // loop_header
                %s642 = sphi 0, %s646
                %p643 = scmp.ge.s32.totalorder %s642, 1
                %s647 = sphi %s630, %s630
                %s648 = sphi %s636, %s636
              $region113: #{attention_gate_forward.1} parent=109 // loop_header_branch
                %645 = sbr.rel (%p643) target = $region117
              $region114: #{attention_gate_forward.1} parent=109 // loop_body
                %v649 = vld [vmem:[%s647] sm:$0xff]
                %650 = vst [vmem:[%s648] sm:$0xff] %v649
                %v651 = vld [vmem:[%s647 + $0x8] sm:$0xff]
                %652 = vst [vmem:[%s648 + $0x8] sm:$0xff] %v651
                %v653 = vld [vmem:[%s647 + $0x10] sm:$0xff]
                %654 = vst [vmem:[%s648 + $0x20] sm:$0xff] %v653
                %v655 = vld [vmem:[%s647 + $0x18] sm:$0xff]
                %656 = vst [vmem:[%s648 + $0x28] sm:$0xff] %v655
                %v657 = vld [vmem:[%s647 + $0x20] sm:$0xff]
                %658 = vst [vmem:[%s648 + $0x40] sm:$0xff] %v657
                %v659 = vld [vmem:[%s647 + $0x28] sm:$0xff]
                %660 = vst [vmem:[%s648 + $0x48] sm:$0xff] %v659
                %v661 = vld [vmem:[%s647 + $0x30] sm:$0xff]
                %662 = vst [vmem:[%s648 + $0x60] sm:$0xff] %v661
                %v663 = vld [vmem:[%s647 + $0x38] sm:$0xff]
                %664 = vst [vmem:[%s648 + $0x68] sm:$0xff] %v663
              $region115: #{attention_gate_forward.1} parent=109 // loop_footer
                %s646 = sadd.s32 1, %s642
              $region116: #{attention_gate_forward.1} parent=109 // loop_footer_branch
                %641 = sbr.rel target = $region112
              $region117: #{attention_gate_forward.1} parent=109 // loop_exit
                _
            $region110: #{attention_gate_forward.1} parent=105 // pred_fallthru
              _
            // Predicated region
            $region118: #{attention_gate_forward.1} parent=105 // pred_check
              _
            $region119: #{attention_gate_forward.1} parent=105 // pred_check_branch
              %666 = sbr.rel target = $region121
            $region120: #{attention_gate_forward.1} parent=105 // pred_region
              _
            $region121: #{attention_gate_forward.1} parent=105 // pred_fallthru
              _
          $region106: #{attention_gate_forward.1} parent=101 // pred_fallthru
            _
          %667 = vnop
        $region102: #{attention_gate_forward.1} parent=89 // pred_fallthru
          _
      $region90: #{attention_gate_forward.1} parent=5 // pred_fallthru
        _
      %p668 = scmp.le.s32.totalorder 2, %s16
      // Predicated region
      $region122: #{attention_gate_forward.1} parent=5 // pred_check
        %p669 = pneg %p668
      $region123: #{attention_gate_forward.1} parent=5 // pred_check_branch
        %671 = sbr.rel (%p669) target = $region125
      $region124: #{attention_gate_forward.1} parent=5 // pred_region
        %s672 = ssub.s32 %s16, 2
        // Predicated region
        $region126: #{attention_gate_forward.1} parent=124 // pred_check
          %p673 = pneg %p223
        $region127: #{attention_gate_forward.1} parent=124 // pred_check_branch
          %675 = sbr.rel (%p673) target = $region129
        $region128: #{attention_gate_forward.1} parent=124 // pred_region
          %s676 = sand.u32 %s208, 1
          %s677 = sand.u32 %s208, 1
          %s678 = smul.addr %s677, 64
          %s679 = scalar_lea.vmem [#allocation5], %s678
        $region129: #{attention_gate_forward.1} parent=124 // pred_fallthru
          _
      $region125: #{attention_gate_forward.1} parent=5 // pred_fallthru
        _
    $region6: #{attention_gate_forward.1} parent=1 // loop_footer
      %s20 = sadd.s32 1, %s16
    $region7: #{attention_gate_forward.1} parent=1 // loop_footer_branch
      %15 = sbr.rel target = $region3
    $region8: #{attention_gate_forward.1} parent=1 // loop_exit
      _

</llo_original>
